<compile_context>
chip_gen: v5e
topology: v5e:2x2
jax: 0.10.0
libtpu: 0.0.40
codegen_flags: <defaults>
</compile_context>

<pallas_src>
import numpy as np
import jax
import jax.numpy as jnp
from jax.experimental import pallas as pl
from jax.experimental.pallas import tpu as pltpu


def _adaptive_avg_pool_matrix(in_size: int, out_size: int) -> np.ndarray:
    """(out_size, in_size) linear map equivalent to torch AdaptiveAvgPool1d."""
    mat = np.zeros((out_size, in_size), dtype=np.float32)
    for i in range(out_size):
        start = (i * in_size) // out_size
        end = -((-(i + 1) * in_size) // out_size)  # ceil((i+1)*in/out)
        mat[i, start:end] = 1.0 / float(end - start)
    return mat


def _head_kernel(x_ref, poolT_ref, w_ref, b_ref, o_ref, acc_ref):
    # x_ref:     (Bt, C, tS)  channels-on-sublanes / spatial-on-lanes input tile
    # poolT_ref: (tS, P)      transposed adaptive-avg-pool matrix tile
    # w_ref:     (N, C)       1x1-conv weight
    # b_ref:     (N, 1)       conv bias (f32)
    # o_ref:     (Bt, N, P)   logits^T per batch: P is the lane dim (lane-dense stores)
    # acc_ref:   (Bt*C, P)    f32 pooled^T accumulator, resident across the S axis
    k = pl.program_id(1)
    Bt, C, tS = x_ref.shape

    @pl.when(k == 0)
    def _init():
        acc_ref[...] = jnp.zeros_like(acc_ref)

    # pooled^T += x @ pool^T : contract over the (long) spatial axis on the MXU.
    # C is padded to a multiple of 8 in the wrapper, so this reshape is layout-free.
    x = x_ref[...].reshape(Bt * C, tS)
    acc_ref[...] += jnp.dot(x, poolT_ref[...], preferred_element_type=jnp.float32)

    @pl.when(k == pl.num_programs(1) - 1)
    def _finalize():
        w = w_ref[...]                                       # (N, C)
        b = b_ref[...].astype(jnp.float32)                   # (N, 1)
        acc = acc_ref[...]                                    # (Bt*C, P) f32
        for i in range(Bt):                                   # static unroll, Bt is small
            pooled_i = acc[i * C:(i + 1) * C, :].astype(w.dtype)                  # (C, P)
            logits_t = jnp.dot(w, pooled_i, preferred_element_type=jnp.float32)   # (N, P)
            o_ref[i] = (logits_t + b).astype(o_ref.dtype)


def _pick_batch_tile(B, per_batch_block_bytes, budget_bytes=8 << 20):
    """Largest divisor of B whose (double-buffered) x block fits the budget while keeping
    >= 2 steps on the parallel batch axis (so v7x's 2 TensorCores both get work)."""
    best = 1
    for bt in range(1, B + 1):
        if B % bt:
            continue
        if 2 * bt * per_batch_block_bytes > budget_bytes:
            continue
        if B > 1 and B // bt < 2:
            continue
        best = bt
    return best


def ensemble_classification_head(x, conv_w, conv_b, ada_pool_size, *,
                                 compute_dtype=jnp.bfloat16,
                                 batch_tile=None, s_tile=None,
                                 vmem_limit_bytes=None):
    """x: (B, H, W, C) channels-last.  Returns (B, num_classes, P1, P2) NCHW, float32."""
    B, H, W, C = x.shape
    P1, P2 = ada_pool_size
    N = conv_w.shape[0]
    P, S = P1 * P2, H * W

    # --- pooling matrix (host numpy; exact AdaptiveAvgPool2d incl. non-divisible) ---
    pool_np = np.kron(_adaptive_avg_pool_matrix(H, P1),
                      _adaptive_avg_pool_matrix(W, P2))              # (P, S)
    poolT = jnp.asarray(pool_np.T, dtype=compute_dtype)              # (S, P)

    # --- channels-first / spatial-flattened input (this IS the module's Permute) ---
    x_cs = jnp.transpose(x.reshape(B, S, C), (0, 2, 1)).astype(compute_dtype)  # (B, C, S)
    w2 = conv_w.reshape(N, C).astype(compute_dtype)                  # (N, C)
    b2 = conv_b.reshape(N, 1).astype(jnp.float32)                    # (N, 1)

    # --- pad C to a sublane multiple so (Bt, C, tS) -> (Bt*C, tS) is a free reshape ---
    C_pad = -(-C // 8) * 8
    if C_pad != C:
        x_cs = jnp.pad(x_cs, ((0, 0), (0, C_pad - C), (0, 0)))
        w2 = jnp.pad(w2, ((0, 0), (0, C_pad - C)))

    # --- S tiling: full S when small, else 128-aligned tiles on an 'arbitrary' axis ---
    # Conservative for v7x's 64 MiB VMEM.  TODO(synk): query pltpu.get_tpu_info() and use
    # ~2x larger tiles + a raised vmem_limit_bytes on v5e/v6e (128 MiB VMEM).
    if s_tile is None:
        s_tile = S if S <= 4096 else 2048
    s_tile = min(s_tile, S)
    if s_tile != S:
        s_tile = max(128, (s_tile // 128) * 128)
    S_pad = -(-S // s_tile) * s_tile
    if S_pad != S:  # zero-pad: padded spatial positions contribute 0 to the pooled sum
        x_cs = jnp.pad(x_cs, ((0, 0), (0, 0), (0, S_pad - S)))
        poolT = jnp.pad(poolT, ((0, S_pad - S), (0, 0)))

    # --- batch tiling: amortize per-grid-step overhead across several batches ---
    bytes_el = jnp.dtype(compute_dtype).itemsize
    if batch_tile is None:
        batch_tile = _pick_batch_tile(B, C_pad * s_tile * bytes_el)
    Bt = batch_tile
    assert B % Bt == 0

    cp = dict(dimension_semantics=("parallel", "arbitrary"))
    if vmem_limit_bytes is not None:
        cp["vmem_limit_bytes"] = vmem_limit_bytes

    out_t = pl.pallas_call(
        _head_kernel,
        out_shape=jax.ShapeDtypeStruct((B, N, P), jnp.float32),
        grid=(B // Bt, S_pad // s_tile),
        in_specs=[
            pl.BlockSpec((Bt, C_pad, s_tile), lambda b, k: (b, 0, k)),
            pl.BlockSpec((s_tile, P), lambda b, k: (k, 0)),
            pl.BlockSpec((N, C_pad), lambda b, k: (0, 0)),
            pl.BlockSpec((N, 1), lambda b, k: (0, 0)),
        ],
        out_specs=pl.BlockSpec((Bt, N, P), lambda b, k: (b, 0, 0)),
        scratch_shapes=[pltpu.VMEM((Bt * C_pad, P), jnp.float32)],
        compiler_params=pltpu.CompilerParams(**cp),
    )(x_cs, poolT, w2, b2)

    # already (B, num_classes, P1*P2): only a reshape (no transpose) back to NCHW
    return out_t.reshape(B, N, P1, P2)


def _reference(x, conv_w, conv_b, ada_pool_size):
    """Pure-JAX reference (divisible pooling case) mirroring the torch forward."""
    B, H, W, C = x.shape
    P1, P2 = ada_pool_size
    kh, kw = H // P1, W // P2
    x_nchw = jnp.transpose(x, (0, 3, 1, 2))                          # Permute
    pooled = x_nchw.reshape(B, C, P1, kh, P2, kw).mean(axis=(3, 5))  # AdaptiveAvgPool2d
    w = conv_w.reshape(conv_w.shape[0], C)
    return jnp.einsum('nc,bcpq->bnpq', w, pooled) + conv_b[None, :, None, None]


if __name__ == "__main__":
    key = jax.random.PRNGKey(0)

    def make_case(k, B, H, W, C, N):
        k1, k2, k3 = jax.random.split(k, 3)
        x = jax.random.normal(k1, (B, H, W, C), jnp.float32)
        bound = 1.0 / np.sqrt(C)
        conv_w = jax.random.uniform(k2, (N, C, 1, 1), jnp.float32, -bound, bound)
        conv_b = jax.random.uniform(k3, (N,), jnp.float32, -bound, bound)
        return x, conv_w, conv_b

    k_a, k_b = jax.random.split(key)

    # case 1: B=2, C=8, 16x16 spatial, 8x8 pool — bf16 compute (default) + f32 check
    x, w, b = make_case(k_a, B=2, H=16, W=16, C=8, N=10)
    pool = (8, 8)
    ref = _reference(x, w, b, pool)

    out_bf16 = jax.block_until_ready(ensemble_classification_head(x, w, b, pool))
    assert out_bf16.shape == (2, 10, 8, 8)
    np.testing.assert_allclose(np.asarray(out_bf16), np.asarray(ref), rtol=5e-2, atol=5e-2)

    out_f32 = jax.block_until_ready(
        ensemble_classification_head(x, w, b, pool, compute_dtype=jnp.float32))
    np.testing.assert_allclose(np.asarray(out_f32), np.asarray(ref), rtol=1e-5, atol=1e-5)

    # case 2: B=4, C=12 (exercises channel padding and Bt=2 batching), f32 compute
    x2, w2_, b2_ = make_case(k_b, B=4, H=16, W=16, C=12, N=10)
    out2 = jax.block_until_ready(
        ensemble_classification_head(x2, w2_, b2_, (8, 8), compute_dtype=jnp.float32))
    ref2 = _reference(x2, w2_, b2_, (8, 8))
    assert out2.shape == (4, 10, 8, 8)
    np.testing.assert_allclose(np.asarray(out2), np.asarray(ref2), rtol=1e-5, atol=1e-5)

    print("KERNEL_OK")
</pallas_src>

<mosaic_0001>
module attributes {stable_mosaic.version = 11 : i64} {
  func.func @_head_kernel(%arg0: i32, %arg1: i32, %arg2: memref<1x8x256xbf16, #tpu.memory_space<vmem>>, %arg3: memref<256x64xbf16, #tpu.memory_space<vmem>>, %arg4: memref<10x8xbf16, #tpu.memory_space<vmem>>, %arg5: memref<10x1xf32, #tpu.memory_space<vmem>>, %arg6: memref<1x10x64xf32, #tpu.memory_space<vmem>>, %arg7: memref<8x64xf32, #tpu.memory_space<vmem>>) attributes {dimension_semantics = [#tpu.dimension_semantics<parallel>, #tpu.dimension_semantics<arbitrary>], iteration_bounds = array<i64: 2, 1>, scalar_prefetch = 0 : i64, scratch_operands = 1 : i64, tpu.core_type = #tpu.core_type<tc>, window_params = [{transform_indices = @transform_0, window_bounds = array<i64: 1, 8, 256>}, {transform_indices = @transform_1, window_bounds = array<i64: 256, 64>}, {pipeline_mode = #tpu.pipeline_mode<synchronous>, transform_indices = @transform_2, window_bounds = array<i64: 10, 8>}, {pipeline_mode = #tpu.pipeline_mode<synchronous>, transform_indices = @transform_3, window_bounds = array<i64: 10, 1>}, {transform_indices = @transform_4, window_bounds = array<i64: 1, 10, 64>}]} {
    %c0_i32 = arith.constant 0 : i32
    %0 = arith.cmpi eq, %arg1, %c0_i32 : i32
    %1 = arith.extui %0 : i1 to i32
    %c0_i32_0 = arith.constant 0 : i32
    %2 = arith.cmpi ne, %1, %c0_i32_0 : i32
    scf.if %2 {
      %cst_11 = arith.constant 0.000000e+00 : f32
      %13 = vector.broadcast %cst_11 : f32 to vector<8x64xf32>
      %c0_12 = arith.constant 0 : index
      %c0_13 = arith.constant 0 : index
      %14 = vector.load %arg7[%c0_12, %c0_13] : memref<8x64xf32, #tpu.memory_space<vmem>>, vector<8x64xf32>
      tpu.vector_store %arg7[%c0_12, %c0_13], %13 {strides = array<i32>} : memref<8x64xf32, #tpu.memory_space<vmem>>, vector<8x64xf32>,
    } else {
    }
    %c0 = arith.constant 0 : index
    %c0_1 = arith.constant 0 : index
    %c0_2 = arith.constant 0 : index
    %3 = vector.load %arg2[%c0, %c0_1, %c0_2] : memref<1x8x256xbf16, #tpu.memory_space<vmem>>, vector<1x8x256xbf16>
    %4 = vector.shape_cast %3 : vector<1x8x256xbf16> to vector<8x256xbf16>
    %c0_3 = arith.constant 0 : index
    %c0_4 = arith.constant 0 : index
    %5 = vector.load %arg7[%c0_3, %c0_4] : memref<8x64xf32, #tpu.memory_space<vmem>>, vector<8x64xf32>
    %c0_5 = arith.constant 0 : index
    %c0_6 = arith.constant 0 : index
    %6 = vector.load %arg3[%c0_5, %c0_6] : memref<256x64xbf16, #tpu.memory_space<vmem>>, vector<256x64xbf16>
    %cst = arith.constant dense<0.000000e+00> : vector<8x64xf32>
    %7 = tpu.matmul %4, %6, %cst {dimension_numbers = #tpu.dot_dimension_numbers<[1], [0], [0], [1], [0, 0, 1, 1], [], []>} : vector<8x256xbf16>, vector<256x64xbf16>, vector<8x64xf32> -> vector<8x64xf32>
    %8 = arith.addf %5, %7 : vector<8x64xf32>
    %c0_7 = arith.constant 0 : index
    %c0_8 = arith.constant 0 : index
    %9 = vector.load %arg7[%c0_7, %c0_8] : memref<8x64xf32, #tpu.memory_space<vmem>>, vector<8x64xf32>
    tpu.vector_store %arg7[%c0_7, %c0_8], %8 {strides = array<i32>} : memref<8x64xf32, #tpu.memory_space<vmem>>, vector<8x64xf32>,
    %c0_i32_9 = arith.constant 0 : i32
    %10 = arith.cmpi eq, %arg1, %c0_i32_9 : i32
    %11 = arith.extui %10 : i1 to i32
    %c0_i32_10 = arith.constant 0 : i32
    %12 = arith.cmpi ne, %11, %c0_i32_10 : i32
    scf.if %12 {
      %c0_11 = arith.constant 0 : index
      %c0_12 = arith.constant 0 : index
      %13 = vector.load %arg4[%c0_11, %c0_12] : memref<10x8xbf16, #tpu.memory_space<vmem>>, vector<10x8xbf16>
      %c0_13 = arith.constant 0 : index
      %c0_14 = arith.constant 0 : index
      %14 = vector.load %arg5[%c0_13, %c0_14] : memref<10x1xf32, #tpu.memory_space<vmem>>, vector<10x1xf32>
      %c0_15 = arith.constant 0 : index
      %c0_16 = arith.constant 0 : index
      %15 = vector.load %arg7[%c0_15, %c0_16] : memref<8x64xf32, #tpu.memory_space<vmem>>, vector<8x64xf32>
      %16 = arith.truncf %15 : vector<8x64xf32> to vector<8x64xbf16>
      %cst_17 = arith.constant dense<0.000000e+00> : vector<10x64xf32>
      %17 = tpu.matmul %13, %16, %cst_17 {dimension_numbers = #tpu.dot_dimension_numbers<[1], [0], [0], [1], [0, 0, 1, 1], [], []>} : vector<10x8xbf16>, vector<8x64xbf16>, vector<10x64xf32> -> vector<10x64xf32>
      %18 = vector.broadcast %14 : vector<10x1xf32> to vector<10x64xf32>
      %19 = arith.addf %17, %18 : vector<10x64xf32>
      %c0_18 = arith.constant 0 : index
      %c0_19 = arith.constant 0 : index
      %c0_20 = arith.constant 0 : index
      %20 = vector.load %arg6[%c0_18, %c0_19, %c0_20] : memref<1x10x64xf32, #tpu.memory_space<vmem>>, vector<1x10x64xf32>
      %21 = vector.shape_cast %20 : vector<1x10x64xf32> to vector<10x64xf32>
      %22 = vector.shape_cast %19 : vector<10x64xf32> to vector<1x10x64xf32>
      tpu.vector_store %arg6[%c0_18, %c0_19, %c0_20], %22 {strides = array<i32>} : memref<1x10x64xf32, #tpu.memory_space<vmem>>, vector<1x10x64xf32>,
    } else {
    }
    return
  }
  func.func @transform_0(%arg0: i32, %arg1: i32) -> (i32, i32, i32) {
    %c0_i32 = arith.constant 0 : i32
    %c0_i32_0 = arith.constant 0 : i32
    return %arg0, %c0_i32, %arg1 : i32, i32, i32
  }
  func.func @transform_1(%arg0: i32, %arg1: i32) -> (i32, i32) {
    %c0_i32 = arith.constant 0 : i32
    %c0_i32_0 = arith.constant 0 : i32
    return %arg1, %c0_i32 : i32, i32
  }
  func.func @transform_2(%arg0: i32, %arg1: i32) -> (i32, i32) {
    %c0_i32 = arith.constant 0 : i32
    %c0_i32_0 = arith.constant 0 : i32
    %c0_i32_1 = arith.constant 0 : i32
    return %c0_i32, %c0_i32_0 : i32, i32
  }
  func.func @transform_3(%arg0: i32, %arg1: i32) -> (i32, i32) {
    %c0_i32 = arith.constant 0 : i32
    %c0_i32_0 = arith.constant 0 : i32
    %c0_i32_1 = arith.constant 0 : i32
    return %c0_i32, %c0_i32_0 : i32, i32
  }
  func.func @transform_4(%arg0: i32, %arg1: i32) -> (i32, i32, i32) {
    %c0_i32 = arith.constant 0 : i32
    %c0_i32_0 = arith.constant 0 : i32
    %c0_i32_1 = arith.constant 0 : i32
    return %arg0, %c0_i32, %c0_i32_0 : i32, i32, i32
  }
}

</mosaic_0001>

<llo_original>
// kernel: tpu_custom_call.1
$region0: #{tpu_custom_call.1}
  #allocation0 [shape = 'u32[]', space=smem, size = 0x4, offset = 0x4, fixed_abs, tag = 'smem constant byte address 0x4 - core index']
  #allocation1 [shape = 'u32[72,128]{1,0:T(1,128)}', space=vmem, size = 0x9000, scoped, tag = 'internal scratch']
  #allocation2 [shape = 'f32[8,64]{1,0:T(8,128)}', space=vmem, size = 0x1000, scoped, tag = 'scratch operand']
  %s0 = inlined_call_operand.vmem [shape: bf16[2,8,256], index: 0, kind: input, shape index: {}]
  %s1 = inlined_call_operand.vmem [shape: bf16[256,64], index: 1, kind: input, shape index: {}]
  %s2 = inlined_call_operand.vmem [shape: bf16[10,8], index: 2, kind: input, shape index: {}]
  %s3 = inlined_call_operand.vmem [shape: f32[10,1], index: 3, kind: input, shape index: {}]
  %s4 = inlined_call_operand.vmem [shape: f32[2,10,64], index: 4, kind: output, shape index: {}]
  %s5 = sld [smem:[#allocation0]]
  $region57: #{tpu_custom_call.1} parent=0
    _
  %s7 = ssub.s32 1, %s5
  %s8 = scalar_select 0, %s7, %s5
  loop: start=0, step=1, limit=4
  $region2: #{tpu_custom_call.1} parent=0 // loop_pre_header
    _
  $region3: #{tpu_custom_call.1} parent=0 // loop_header
    %s10 = sphi 0, %s14
    %p11 = scmp.ge.s32.totalorder %s10, 4
    %s17 = sphi 0, %s29
    %s18 = sphi 0, %s25
    %s19 = sphi 0, %s17
    %s20 = sphi 0, %s18
    %s21 = sphi 0, %s19
    %s22 = sphi 0, %s20
    %s34 = sphi 0, %s36
    %s37 = sphi 0, %s34
    %s38 = sphi 0, %s37
    %s54 = sphi 0, %s38
    %s60 = sphi 0, %s62
    %s63 = sphi 0, %s60
    %s64 = sphi 0, %s63
    %s80 = sphi 0, %s64
    %s84 = sphi 0, %s84
    %s86 = sphi 0, %s84
    %s87 = sphi 0, %s86
    %s101 = sphi 0, %s87
    %s105 = sphi 0, %s105
    %s107 = sphi 0, %s105
    %s108 = sphi 0, %s107
    %s122 = sphi 0, %s108
    %s128 = sphi 0, %s130
    %s131 = sphi 0, %s128
    %s132 = sphi 0, %s131
    %s148 = sphi 0, %s132
  $region4: #{tpu_custom_call.1} parent=0 // loop_header_branch
    %13 = sbr.rel (%p11) target = $region8
  $region5: #{tpu_custom_call.1} parent=0 // loop_body
    %s15 = ssub.s32 %s10, 1
    %s16 = ssub.s32 %s10, 2
    %s23 = sadd.s32 1, %s18
    %p24 = scmp.ge.s32.totalorder %s23, 1
    %s25 = scalar_select %p24, 0, %s23
    %s26 = sadd.s32 1, %s17
    %s27 = scalar_select %p24, %s26, %s17
    %p28 = scmp.ge.s32.totalorder %s27, 2
    %s29 = scalar_select %p28, 0, %s27
    %s30 = ssub.s32 %s17, %s29
    %s31 = ssub.s32 %s18, %s25
    %s32 = sor.u32 %s30, %s31
    %p33 = scmp.eq.s32.totalorder %s32, 0
    %s35 = sadd.s32 %s34, 1
    %s36 = scalar_select %p33, %s34, %s35
    %p39 = pneg %p33
    %p40 = scmp.eq.s32.totalorder %s10, 1
    %p41 = por %p39, %p40
    %p42 = scmp.ne.s32.totalorder %s34, %s37
    %p43 = scmp.eq.s32.totalorder %s10, 0
    %p44 = por %p42, %p43
    %p45 = scmp.ne.s32.totalorder %s34, %s37
    %p46 = scmp.eq.s32.totalorder %s15, 1
    %p47 = por %p45, %p46
    %p48 = scmp.ne.s32.totalorder %s37, %s38
    %p49 = scmp.eq.s32.totalorder %s15, 0
    %p50 = por %p48, %p49
    %p51 = scmp.ne.s32.totalorder %s37, %s38
    %p52 = scmp.eq.s32.totalorder %s16, 1
    %p53 = por %p51, %p52
    %p55 = scmp.ne.s32.totalorder %s38, %s54
    %p56 = scmp.eq.s32.totalorder %s16, 0
    %p57 = por %p55, %p56
    %s58 = ssub.s32 %s18, %s25
    %p59 = scmp.eq.s32.totalorder %s58, 0
    %s61 = sadd.s32 %s60, 1
    %s62 = scalar_select %p59, %s60, %s61
    %p65 = pneg %p59
    %p66 = scmp.eq.s32.totalorder %s10, 1
    %p67 = por %p65, %p66
    %p68 = scmp.ne.s32.totalorder %s60, %s63
    %p69 = scmp.eq.s32.totalorder %s10, 0
    %p70 = por %p68, %p69
    %p71 = scmp.ne.s32.totalorder %s60, %s63
    %p72 = scmp.eq.s32.totalorder %s15, 1
    %p73 = por %p71, %p72
    %p74 = scmp.ne.s32.totalorder %s63, %s64
    %p75 = scmp.eq.s32.totalorder %s15, 0
    %p76 = por %p74, %p75
    %p77 = scmp.ne.s32.totalorder %s63, %s64
    %p78 = scmp.eq.s32.totalorder %s16, 1
    %p79 = por %p77, %p78
    %p81 = scmp.ne.s32.totalorder %s64, %s80
    %p82 = scmp.eq.s32.totalorder %s16, 0
    %p83 = por %p81, %p82
    %s85 = sadd.s32 %s84, 1
    %p88 = scmp.eq.s32.totalorder %s10, 1
    %p89 = scmp.ne.s32.totalorder %s84, %s86
    %p90 = scmp.eq.s32.totalorder %s10, 0
    %p91 = por %p89, %p90
    %p92 = scmp.ne.s32.totalorder %s84, %s86
    %p93 = scmp.eq.s32.totalorder %s15, 1
    %p94 = por %p92, %p93
    %p95 = scmp.ne.s32.totalorder %s86, %s87
    %p96 = scmp.eq.s32.totalorder %s15, 0
    %p97 = por %p95, %p96
    %p98 = scmp.ne.s32.totalorder %s86, %s87
    %p99 = scmp.eq.s32.totalorder %s16, 1
    %p100 = por %p98, %p99
    %p102 = scmp.ne.s32.totalorder %s87, %s101
    %p103 = scmp.eq.s32.totalorder %s16, 0
    %p104 = por %p102, %p103
    %s106 = sadd.s32 %s105, 1
    %p109 = scmp.eq.s32.totalorder %s10, 1
    %p110 = scmp.ne.s32.totalorder %s105, %s107
    %p111 = scmp.eq.s32.totalorder %s10, 0
    %p112 = por %p110, %p111
    %p113 = scmp.ne.s32.totalorder %s105, %s107
    %p114 = scmp.eq.s32.totalorder %s15, 1
    %p115 = por %p113, %p114
    %p116 = scmp.ne.s32.totalorder %s107, %s108
    %p117 = scmp.eq.s32.totalorder %s15, 0
    %p118 = por %p116, %p117
    %p119 = scmp.ne.s32.totalorder %s107, %s108
    %p120 = scmp.eq.s32.totalorder %s16, 1
    %p121 = por %p119, %p120
    %p123 = scmp.ne.s32.totalorder %s108, %s122
    %p124 = scmp.eq.s32.totalorder %s16, 0
    %p125 = por %p123, %p124
    %s126 = ssub.s32 %s17, %s29
    %p127 = scmp.eq.s32.totalorder %s126, 0
    %s129 = sadd.s32 %s128, 1
    %s130 = scalar_select %p127, %s128, %s129
    %p133 = pneg %p127
    %p134 = scmp.eq.s32.totalorder %s10, 1
    %p135 = por %p133, %p134
    %p136 = scmp.ne.s32.totalorder %s128, %s131
    %p137 = scmp.eq.s32.totalorder %s10, 0
    %p138 = por %p136, %p137
    %p139 = scmp.ne.s32.totalorder %s128, %s131
    %p140 = scmp.eq.s32.totalorder %s15, 1
    %p141 = por %p139, %p140
    %p142 = scmp.ne.s32.totalorder %s131, %s132
    %p143 = scmp.eq.s32.totalorder %s15, 0
    %p144 = por %p142, %p143
    %p145 = scmp.ne.s32.totalorder %s131, %s132
    %p146 = scmp.eq.s32.totalorder %s16, 1
    %p147 = por %p145, %p146
    %p149 = scmp.ne.s32.totalorder %s132, %s148
    %p150 = scmp.eq.s32.totalorder %s16, 0
    %p151 = por %p149, %p150
    %p152 = scmp.le.s32.totalorder 1, %s10
    %p153 = scmp.lt.s32.totalorder %s10, 3
    %p154 = pnand %p152, %p153
    %p155 = pneg %p154
    // Predicated region
    $region9: #{tpu_custom_call.1} parent=5 // pred_check
      _
    $region10: #{tpu_custom_call.1} parent=5 // pred_check_branch
      %157 = sbr.rel (%p154) target = $region12
    $region11: #{tpu_custom_call.1} parent=5 // pred_region
      %s158 = ssub.s32 %s10, 1
      // Predicated region
      $region13: #{tpu_custom_call.1} parent=11 // pred_check
        %p159 = pneg %p76
      $region14: #{tpu_custom_call.1} parent=11 // pred_check_branch
        %161 = sbr.rel (%p159) target = $region16
      $region15: #{tpu_custom_call.1} parent=11 // pred_region
        %s162 = smul.u32 32, %s20
        %p163 = scmp.lt.s32.totalorder %s162, 31
        %s164 = scalar_select %p163, %s162, 31
        %s165 = smul.addr %s164, 4
        %s166 = scalar_lea.vmem %s1, %s165
        %s167 = smul.u32 32, %s20
      $region16: #{tpu_custom_call.1} parent=11 // pred_fallthru
        _
      // Predicated region
      $region17: #{tpu_custom_call.1} parent=11 // pred_check
        %p168 = pneg %p97
      $region18: #{tpu_custom_call.1} parent=11 // pred_check_branch
        %170 = sbr.rel (%p168) target = $region20
      $region19: #{tpu_custom_call.1} parent=11 // pred_region
        _
      $region20: #{tpu_custom_call.1} parent=11 // pred_fallthru
        _
      // Predicated region
      $region21: #{tpu_custom_call.1} parent=11 // pred_check
        %p171 = pneg %p118
      $region22: #{tpu_custom_call.1} parent=11 // pred_check_branch
        %173 = sbr.rel (%p171) target = $region24
      $region23: #{tpu_custom_call.1} parent=11 // pred_region
        _
      $region24: #{tpu_custom_call.1} parent=11 // pred_fallthru
        _
    $region12: #{tpu_custom_call.1} parent=5 // pred_fallthru
      _
    %p174 = scmp.lt.s32.totalorder %s10, 2
    // Predicated region
    $region25: #{tpu_custom_call.1} parent=5 // pred_check
      %p175 = pneg %p174
    $region26: #{tpu_custom_call.1} parent=5 // pred_check_branch
      %177 = sbr.rel (%p175) target = $region28
    $region27: #{tpu_custom_call.1} parent=5 // pred_region
      // Predicated region
      $region29: #{tpu_custom_call.1} parent=27 // pred_check
        %p178 = pneg %p44
      $region30: #{tpu_custom_call.1} parent=27 // pred_check_branch
        %180 = sbr.rel (%p178) target = $region32
      $region31: #{tpu_custom_call.1} parent=27 // pred_region
        %s181 = smul.u32 2, %s18
        %p182 = scmp.lt.s32.totalorder %s17, 1
        %s183 = scalar_select %p182, %s17, 1
        %p184 = scmp.lt.s32.totalorder %s181, 1
        %s185 = scalar_select %p184, %s181, 1
        %s186 = smul.addr %s183, 2
        %s187 = sadd.s32 %s185, %s186
        %s188 = smul.addr %s187, 4
        %s189 = scalar_lea.vmem %s0, %s188
        %s190 = smul.u32 2, %s18
      $region32: #{tpu_custom_call.1} parent=27 // pred_fallthru
        _
    $region28: #{tpu_custom_call.1} parent=5 // pred_fallthru
      _
    %p191 = scmp.le.s32.totalorder 1, %s10
    %p192 = scmp.lt.s32.totalorder %s10, 3
    %p193 = pnand %p191, %p192
    %p194 = pneg %p193
    // Predicated region
    $region33: #{tpu_custom_call.1} parent=5 // pred_check
      _
    $region34: #{tpu_custom_call.1} parent=5 // pred_check_branch
      %196 = sbr.rel (%p193) target = $region36
    $region35: #{tpu_custom_call.1} parent=5 // pred_region
      %s197 = ssub.s32 %s10, 1
      %s198 = smul.u32 2, %s20
      %p199 = scmp.lt.s32.totalorder %s19, 1
      %s200 = scalar_select %p199, %s19, 1
      %p201 = scmp.lt.s32.totalorder %s198, 1
      %s202 = scalar_select %p201, %s198, 1
      %s203 = smul.addr %s200, 2
      %s204 = sadd.s32 %s202, %s203
      %s205 = smul.addr %s204, 4
      %s206 = scalar_lea.vmem %s0, %s205
      %p207 = pneg %p50
      %p208 = pneg %p47
      %s209 = smul.u32 32, %s20
      %p210 = scmp.lt.s32.totalorder %s209, 31
      %s211 = scalar_select %p210, %s209, 31
      %s212 = smul.addr %s211, 4
      %s213 = scalar_lea.vmem %s1, %s212
      %p214 = pneg %p76
      %p215 = pneg %p73
      %p216 = pneg %p97
      %p217 = pneg %p94
      %p218 = pneg %p118
      %p219 = pneg %p115
      %p220 = pneg %p144
      %p221 = pneg %p141
      %p222 = scmp.lt.s32.totalorder %s19, 1
      %s223 = scalar_select %p222, %s19, 1
      %s224 = smul.addr %s223, 2
      %s225 = smul.addr %s224, 8
      %s226 = scalar_lea.vmem %s4, %s225
      %s227 = smul.u32 2, %s20
      %p228 = scmp.lt.s32.totalorder %s19, 1
      %s229 = scalar_select %p228, %s19, 1
      %p230 = scmp.lt.s32.totalorder %s227, 1
      %s231 = scalar_select %p230, %s227, 1
      %s232 = smul.addr %s229, 2
      %s233 = sadd.s32 %s231, %s232
      %s234 = smul.addr %s233, 4
      %s235 = scalar_lea.vmem %s0, %s234
      %s236 = smul.u32 2, %s20
      %s237 = smul.u32 32, %s20
      %p238 = scmp.lt.s32.totalorder %s237, 31
      %s239 = scalar_select %p238, %s237, 31
      %s240 = smul.addr %s239, 4
      %s241 = scalar_lea.vmem %s1, %s240
      %s242 = smul.u32 32, %s20
      %p243 = scmp.lt.s32.totalorder %s19, 1
      %s244 = scalar_select %p243, %s19, 1
      %s245 = smul.addr %s244, 2
      %s246 = smul.addr %s245, 8
      %s247 = scalar_lea.vmem %s4, %s246
      %p249 = scmp.eq.s32.totalorder %s20, 0
      // Predicated region
      $region37: #{tpu_custom_call.1} parent=35 // pred_check
        %p250 = pneg %p249
      $region38: #{tpu_custom_call.1} parent=35 // pred_check_branch
        %252 = sbr.rel (%p250) target = $region40
      $region39: #{tpu_custom_call.1} parent=35 // pred_region
        %vm253 = vcmask 523264
        %254 = vst.msk [vmem:[#allocation2] sm:$0xff] %vm253, 0.0
      $region40: #{tpu_custom_call.1} parent=35 // pred_fallthru
        _
      %v255 = vld [vmem:[%s235] sm:$0xff]
      %v256 = vld [vmem:[#allocation2] sm:$0xff]
      %v257 = vld [vmem:[%s241] sm:$0xf]
      %v258 = vld [vmem:[%s241 + $0x4] sm:$0xf]
      %v259 = vld [vmem:[%s241 + $0x8] sm:$0xf]
      %v260 = vld [vmem:[%s241 + $0xc] sm:$0xf]
      %v261 = vld [vmem:[%s241 + $0x10] sm:$0xf]
      %v262 = vld [vmem:[%s241 + $0x14] sm:$0xf]
      %v263 = vld [vmem:[%s241 + $0x18] sm:$0xf]
      %v264 = vld [vmem:[%s241 + $0x1c] sm:$0xf]
      %v265 = vld [vmem:[%s241 + $0x20] sm:$0xf]
      %v266 = vld [vmem:[%s241 + $0x24] sm:$0xf]
      %v267 = vld [vmem:[%s241 + $0x28] sm:$0xf]
      %v268 = vld [vmem:[%s241 + $0x2c] sm:$0xf]
      %v269 = vld [vmem:[%s241 + $0x30] sm:$0xf]
      %v270 = vld [vmem:[%s241 + $0x34] sm:$0xf]
      %v271 = vld [vmem:[%s241 + $0x38] sm:$0xf]
      %v272 = vld [vmem:[%s241 + $0x3c] sm:$0xf]
      %v273 = vld [vmem:[%s241 + $0x40] sm:$0xf]
      %v274 = vld [vmem:[%s241 + $0x44] sm:$0xf]
      %v275 = vld [vmem:[%s241 + $0x48] sm:$0xf]
      %v276 = vld [vmem:[%s241 + $0x4c] sm:$0xf]
      %v277 = vld [vmem:[%s241 + $0x50] sm:$0xf]
      %v278 = vld [vmem:[%s241 + $0x54] sm:$0xf]
      %v279 = vld [vmem:[%s241 + $0x58] sm:$0xf]
      %v280 = vld [vmem:[%s241 + $0x5c] sm:$0xf]
      %v281 = vld [vmem:[%s241 + $0x60] sm:$0xf]
      %v282 = vld [vmem:[%s241 + $0x64] sm:$0xf]
      %v283 = vld [vmem:[%s241 + $0x68] sm:$0xf]
      %v284 = vld [vmem:[%s241 + $0x6c] sm:$0xf]
      %v285 = vld [vmem:[%s241 + $0x70] sm:$0xf]
      %v286 = vld [vmem:[%s241 + $0x74] sm:$0xf]
      %v287 = vld [vmem:[%s241 + $0x78] sm:$0xf]
      %v288 = vld [vmem:[%s241 + $0x7c] sm:$0xf]
      %v290 = vunpack.c.l.b16 %v255
      %v291 = vunpack.c.h.b16 %v255
      %v292 = vpack.c.b16 %v290, %v290
      %v293 = vpack.c.b16 %v291, %v291
      %v328 = vunpack.c.l.b16 %v257
      %v329 = vunpack.c.l.b16 %v258
      %v330 = vunpack.c.l.b16 %v259
      %v331 = vunpack.c.l.b16 %v260
      %v332 = vunpack.c.l.b16 %v261
      %v333 = vunpack.c.l.b16 %v262
      %v334 = vunpack.c.l.b16 %v263
      %v335 = vunpack.c.l.b16 %v264
      %v336 = vunpack.c.l.b16 %v265
      %v337 = vunpack.c.l.b16 %v266
      %v338 = vunpack.c.l.b16 %v267
      %v339 = vunpack.c.l.b16 %v268
      %v340 = vunpack.c.l.b16 %v269
      %v341 = vunpack.c.l.b16 %v270
      %v342 = vunpack.c.l.b16 %v271
      %v343 = vunpack.c.l.b16 %v272
      %v344 = vunpack.c.l.b16 %v273
      %v345 = vunpack.c.l.b16 %v274
      %v346 = vunpack.c.l.b16 %v275
      %v347 = vunpack.c.l.b16 %v276
      %v348 = vunpack.c.l.b16 %v277
      %v349 = vunpack.c.l.b16 %v278
      %v350 = vunpack.c.l.b16 %v279
      %v351 = vunpack.c.l.b16 %v280
      %v352 = vunpack.c.l.b16 %v281
      %v353 = vunpack.c.l.b16 %v282
      %v354 = vunpack.c.l.b16 %v283
      %v355 = vunpack.c.l.b16 %v284
      %v356 = vunpack.c.l.b16 %v285
      %v357 = vunpack.c.l.b16 %v286
      %v358 = vunpack.c.l.b16 %v287
      %v359 = vunpack.c.l.b16 %v288
      %v360 = vpack.c.b16 %v329, %v328
      %v361 = vpack.c.b16 %v331, %v330
      %v362 = vpack.c.b16 %v333, %v332
      %v363 = vpack.c.b16 %v335, %v334
      %v364 = vpack.c.b16 %v337, %v336
      %v365 = vpack.c.b16 %v339, %v338
      %v366 = vpack.c.b16 %v341, %v340
      %v367 = vpack.c.b16 %v343, %v342
      %v368 = vpack.c.b16 %v345, %v344
      %v369 = vpack.c.b16 %v347, %v346
      %v370 = vpack.c.b16 %v349, %v348
      %v371 = vpack.c.b16 %v351, %v350
      %v372 = vpack.c.b16 %v353, %v352
      %v373 = vpack.c.b16 %v355, %v354
      %v374 = vpack.c.b16 %v357, %v356
      %v375 = vpack.c.b16 %v359, %v358
      %392 = vmatpush.bf16.msra.mxu0 %v367
      %393 = vmatpush.bf16.msra.mxu0 %v366
      %394 = vmatpush.bf16.msra.mxu0 %v365
      %395 = vmatpush.bf16.msra.mxu0 %v364
      %396 = vmatpush.bf16.msra.mxu0 %v363
      %397 = vmatpush.bf16.msra.mxu0 %v362
      %398 = vmatpush.bf16.msra.mxu0 %v361
      %399 = vmatpush.bf16.msra.mxu0 %v360
      %400 = vmatmul.bf16.gmra.mxu0 %v292
      %v401 = vpop.f32.mrf.mxu0
      %v402 = vadd.f32 0.0, %v401
      %v403 = vpop.f32.mrf.mxu0
      %404 = vdwg.mxu0
      %405 = vmatpush.bf16.msra.mxu0 %v375
      %406 = vmatpush.bf16.msra.mxu0 %v374
      %407 = vmatpush.bf16.msra.mxu0 %v373
      %408 = vmatpush.bf16.msra.mxu0 %v372
      %409 = vmatpush.bf16.msra.mxu0 %v371
      %410 = vmatpush.bf16.msra.mxu0 %v370
      %411 = vmatpush.bf16.msra.mxu0 %v369
      %412 = vmatpush.bf16.msra.mxu0 %v368
      %413 = vmatmul.bf16.gmra.mxu0 %v293
      %v414 = vpop.f32.mrf.mxu0
      %v415 = vadd.f32 %v402, %v414
      %v416 = vpop.f32.mrf.mxu0
      %417 = vdwg.mxu0
      %v418 = vadd.f32 %v256, %v415
      %vm419 = vcmask 523264
      %420 = vst.msk [vmem:[#allocation2] sm:$0xff] %vm419, %v418
      // Predicated region
      $region41: #{tpu_custom_call.1} parent=35 // pred_check
        %p421 = pneg %p249
      $region42: #{tpu_custom_call.1} parent=35 // pred_check_branch
        %423 = sbr.rel (%p421) target = $region44
      $region43: #{tpu_custom_call.1} parent=35 // pred_region
        %v424 = vld [vmem:[%s2] sm:$0xf]
        %v425 = vld [vmem:[%s2 + $0x4] sm:$0x1]
        %v426 = vld [vmem:[%s3] sm:$0xff]
        %v427 = vld [vmem:[%s3 + $0x8] sm:$0x3]
        %v428 = vld [vmem:[#allocation2] sm:$0xff]
        %v429 = vpack.c.bf16 %v428, %v428
        %431 = vset.pattern.permute.xlu0 0
        %432 = vperm.xlu0 %431, %v426
        %v433 = vpop.permute.xlu0 %432
        %436 = vset.pattern.permute.xlu0 0
        %437 = vperm.xlu0 %436, %v427
        %v438 = vpop.permute.xlu0 %437
        %v442 = vunpack.c.l.b16 %v424
        %v443 = vunpack.c.l.b16 %v425
        %v444 = vpack.c.b16 %v443, %v442
        %vm445 = vcmask 64512
        %v447 = vsel %vm445, %v444, 0
        %vm449 = vcmask 1043456
        %v451 = vsel %vm449, %v429, 0
        %453 = vmatpush.bf16.msra.mxu0 0
        %454 = vmatpush.bf16.msra.mxu0 0
        %455 = vmatpush.bf16.msra.mxu0 0
        %456 = vmatpush.bf16.msra.mxu0 0
        %457 = vmatpush.bf16.msra.mxu0 0
        %458 = vmatpush.bf16.msra.mxu0 0
        %459 = vmatpush.bf16.msra.mxu0 0
        %460 = vmatpush.bf16.msra.mxu0 %v451
        %461 = vmatmul.bf16.gmra.mxu0 %v447
        %v462 = vpop.f32.mrf.mxu0
        %v463 = vadd.f32 %v433, %v462
        %v464 = vpop.f32.mrf.mxu0
        %v465 = vadd.f32 %v438, %v464
        %466 = vdwg.mxu0
        %467 = vst.msk [vmem:[%s247] sm:$0xff] %vm419, %v463
        %vm468 = vcmask 517120
        %469 = vst.msk [vmem:[%s247 + $0x8] sm:$0x3] %vm468, %v465
      $region44: #{tpu_custom_call.1} parent=35 // pred_fallthru
        _
      %p470 = scmp.lt.s32.totalorder %s19, 1
      %s471 = scalar_select %p470, %s19, 1
      %s472 = smul.addr %s471, 2
      %s473 = smul.addr %s472, 8
      %s474 = scalar_lea.vmem %s4, %s473
      // Predicated region
      $region45: #{tpu_custom_call.1} parent=35 // pred_check
        %p475 = pneg %p141
      $region46: #{tpu_custom_call.1} parent=35 // pred_check_branch
        %477 = sbr.rel (%p475) target = $region48
      $region47: #{tpu_custom_call.1} parent=35 // pred_region
        _
      $region48: #{tpu_custom_call.1} parent=35 // pred_fallthru
        _
    $region36: #{tpu_custom_call.1} parent=5 // pred_fallthru
      _
    %p478 = scmp.le.s32.totalorder 2, %s10
    // Predicated region
    $region49: #{tpu_custom_call.1} parent=5 // pred_check
      %p479 = pneg %p478
    $region50: #{tpu_custom_call.1} parent=5 // pred_check_branch
      %481 = sbr.rel (%p479) target = $region52
    $region51: #{tpu_custom_call.1} parent=5 // pred_region
      %s482 = ssub.s32 %s10, 2
      // Predicated region
      $region53: #{tpu_custom_call.1} parent=51 // pred_check
        %p483 = pneg %p147
      $region54: #{tpu_custom_call.1} parent=51 // pred_check_branch
        %485 = sbr.rel (%p483) target = $region56
      $region55: #{tpu_custom_call.1} parent=51 // pred_region
        %p486 = scmp.lt.s32.totalorder %s21, 1
        %s487 = scalar_select %p486, %s21, 1
        %s488 = smul.addr %s487, 2
        %s489 = smul.addr %s488, 8
        %s490 = scalar_lea.vmem %s4, %s489
      $region56: #{tpu_custom_call.1} parent=51 // pred_fallthru
        _
    $region52: #{tpu_custom_call.1} parent=5 // pred_fallthru
      _
  $region6: #{tpu_custom_call.1} parent=0 // loop_footer
    %s14 = sadd.s32 1, %s10
  $region7: #{tpu_custom_call.1} parent=0 // loop_footer_branch
    %9 = sbr.rel target = $region3
  $region8: #{tpu_custom_call.1} parent=0 // loop_exit
    _

</llo_original>
